<compile_context>
chip_gen: v7x
topology: tpu7x:2x2x1
jax: 0.10.0
libtpu: 0.0.40
codegen_flags: <defaults>
</compile_context>

<pallas_src>
import jax
import jax.numpy as jnp
from jax.experimental import pallas as pl
from jax.experimental.pallas import tpu as pltpu


BN_EPS = 1e-5


def predictor_kernel(x_ref, w1_ref, gamma_ref, beta_ref, w2_ref, b2_ref, o_ref):
    # fc1: (B, D_in) @ (D_in, H). Bias intentionally omitted: it is cancelled
    # exactly by the train-mode BatchNorm mean subtraction.
    h = jnp.dot(x_ref[...], w1_ref[...], preferred_element_type=jnp.float32)

    # BatchNorm1d (training mode): per-feature stats over the batch (sublane)
    # axis, computed in one pass (sum + sum-of-squares back-to-back).
    inv_b = 1.0 / h.shape[0]
    s1 = jnp.sum(h, axis=0, keepdims=True)
    s2 = jnp.sum(h * h, axis=0, keepdims=True)
    mean = s1 * inv_b
    var = jnp.maximum(s2 * inv_b - mean * mean, 0.0)  # biased variance

    # Fold the BN normalize + affine into a single (1, H) scale/shift.
    scale = gamma_ref[...] * jax.lax.rsqrt(var + BN_EPS)
    shift = beta_ref[...] - mean * scale

    # BN + ReLU: one multiply + one add over the (B, H) tile.
    h_relu = jnp.maximum(h * scale + shift, 0.0)

    # fc2: (B, H) @ (H, D_out) + (1, D_out)
    out = jnp.dot(h_relu, w2_ref[...],
                  preferred_element_type=jnp.float32) + b2_ref[...]
    o_ref[...] = out.astype(o_ref.dtype)


def predictor_forward(x, w1, gamma, beta, w2, b2):
    """x: (B, D_in); w1: (D_in, H); w2: (H, D_out). Returns (B, D_out)."""
    B, D_in = x.shape
    H = w1.shape[1]
    D_out = w2.shape[1]

    itemsize = jnp.dtype(x.dtype).itemsize
    cost = pl.CostEstimate(
        flops=2 * B * (D_in * H + H * D_out),
        transcendentals=H,  # rsqrt over the hidden features
        bytes_accessed=itemsize * (x.size + w1.size + gamma.size + beta.size
                                   + w2.size + b2.size + B * D_out),
    )

    # Small problem: whole arrays fit in VMEM, single block, no grid needed.
    return pl.pallas_call(
        predictor_kernel,
        out_shape=jax.ShapeDtypeStruct((B, D_out), x.dtype),
        in_specs=[
            pl.BlockSpec(memory_space=pltpu.VMEM),  # x
            pl.BlockSpec(memory_space=pltpu.VMEM),  # w1
            pl.BlockSpec(memory_space=pltpu.VMEM),  # gamma
            pl.BlockSpec(memory_space=pltpu.VMEM),  # beta
            pl.BlockSpec(memory_space=pltpu.VMEM),  # w2
            pl.BlockSpec(memory_space=pltpu.VMEM),  # b2
        ],
        out_specs=pl.BlockSpec(memory_space=pltpu.VMEM),
        cost_estimate=cost,
    )(x, w1, gamma, beta, w2, b2)


def reference_forward(x, w1, b1, gamma, beta, w2, b2):
    # Full PyTorch-equivalent reference INCLUDING the fc1 bias, to demonstrate
    # that dropping it in the kernel is exactly equivalent under train-mode BN.
    h = x @ w1 + b1
    mean = jnp.mean(h, axis=0, keepdims=True)
    var = jnp.mean((h - mean) ** 2, axis=0, keepdims=True)
    h = (h - mean) / jnp.sqrt(var + BN_EPS) * gamma + beta
    h = jnp.maximum(h, 0.0)
    return h @ w2 + b2


if __name__ == "__main__":
    # Batched, lane-dense shapes (B multiple of 8, feature dims multiples of
    # 128) consistent with Predictor(input_dim, hidden_dim, output_dim).
    B, D_IN, H, D_OUT = 128, 256, 128, 256

    key = jax.random.PRNGKey(0)
    kx, kw1, kb1, kw2, kb2, kg, kbeta = jax.random.split(key, 7)

    x = jax.random.normal(kx, (B, D_IN), dtype=jnp.float32)

    # Deterministic synthetic parameters (PyTorch shapes: fc1.weight (H, D_IN),
    # fc2.weight (D_OUT, H)); stored pre-transposed as (in, out).
    w1 = jax.random.normal(kw1, (D_IN, H), dtype=jnp.float32) * 0.05
    b1 = jax.random.normal(kb1, (1, H), dtype=jnp.float32) * 0.05  # ref only
    gamma = 1.0 + 0.1 * jax.random.normal(kg, (1, H), dtype=jnp.float32)
    beta = 0.1 * jax.random.normal(kbeta, (1, H), dtype=jnp.float32)
    w2 = jax.random.normal(kw2, (H, D_OUT), dtype=jnp.float32) * 0.05
    b2 = jax.random.normal(kb2, (1, D_OUT), dtype=jnp.float32) * 0.05

    out = predictor_forward(x, w1, gamma, beta, w2, b2)
    out = jax.block_until_ready(out)

    ref = reference_forward(x, w1, b1, gamma, beta, w2, b2)
    assert out.shape == (B, D_OUT)
    assert jnp.allclose(out, ref, atol=1e-4, rtol=1e-4), "mismatch vs reference"

    print("KERNEL_OK")
</pallas_src>

<mosaic_0001>
module attributes {stable_mosaic.version = 11 : i64} {
  func.func @predictor_kernel(%arg0: memref<128x256xf32, #tpu.memory_space<vmem>>, %arg1: memref<256x128xf32, #tpu.memory_space<vmem>>, %arg2: memref<1x128xf32, #tpu.memory_space<vmem>>, %arg3: memref<1x128xf32, #tpu.memory_space<vmem>>, %arg4: memref<128x256xf32, #tpu.memory_space<vmem>>, %arg5: memref<1x256xf32, #tpu.memory_space<vmem>>, %arg6: memref<128x256xf32, #tpu.memory_space<vmem>>) attributes {dimension_semantics = [], scalar_prefetch = 0 : i64, scratch_operands = 0 : i64, tpu.core_type = #tpu.core_type<tc>} {
    %c0 = arith.constant 0 : index
    %c0_0 = arith.constant 0 : index
    %0 = vector.load %arg0[%c0, %c0_0] : memref<128x256xf32, #tpu.memory_space<vmem>>, vector<128x256xf32>
    %c0_1 = arith.constant 0 : index
    %c0_2 = arith.constant 0 : index
    %1 = vector.load %arg1[%c0_1, %c0_2] : memref<256x128xf32, #tpu.memory_space<vmem>>, vector<256x128xf32>
    %cst = arith.constant dense<0.000000e+00> : vector<128x128xf32>
    %2 = tpu.matmul %0, %1, %cst {dimension_numbers = #tpu.dot_dimension_numbers<[1], [0], [0], [1], [0, 0, 1, 1], [], []>} : vector<128x256xf32>, vector<256x128xf32>, vector<128x128xf32> -> vector<128x128xf32>
    %cst_3 = arith.constant dense<0.000000e+00> : vector<128xf32>
    %3 = vector.multi_reduction <add>, %2, %cst_3 [0] : vector<128x128xf32> to vector<128xf32>
    %4 = vector.shape_cast %3 : vector<128xf32> to vector<1x128xf32>
    %5 = arith.mulf %2, %2 : vector<128x128xf32>
    %cst_4 = arith.constant dense<0.000000e+00> : vector<128xf32>
    %6 = vector.multi_reduction <add>, %5, %cst_4 [0] : vector<128x128xf32> to vector<128xf32>
    %7 = vector.shape_cast %6 : vector<128xf32> to vector<1x128xf32>
    %cst_5 = arith.constant 7.812500e-03 : f32
    %8 = vector.broadcast %cst_5 : f32 to vector<1x128xf32>
    %9 = arith.mulf %4, %8 : vector<1x128xf32>
    %cst_6 = arith.constant 7.812500e-03 : f32
    %10 = vector.broadcast %cst_6 : f32 to vector<1x128xf32>
    %11 = arith.mulf %7, %10 : vector<1x128xf32>
    %12 = arith.mulf %9, %9 : vector<1x128xf32>
    %13 = arith.subf %11, %12 : vector<1x128xf32>
    %cst_7 = arith.constant 0.000000e+00 : f32
    %14 = vector.broadcast %cst_7 : f32 to vector<1x128xf32>
    %15 = arith.maximumf %13, %14 : vector<1x128xf32>
    %c0_8 = arith.constant 0 : index
    %c0_9 = arith.constant 0 : index
    %16 = vector.load %arg2[%c0_8, %c0_9] : memref<1x128xf32, #tpu.memory_space<vmem>>, vector<1x128xf32>
    %cst_10 = arith.constant 9.99999974E-6 : f32
    %17 = vector.broadcast %cst_10 : f32 to vector<1x128xf32>
    %18 = arith.addf %15, %17 : vector<1x128xf32>
    %19 = math.rsqrt %18 : vector<1x128xf32>
    %20 = arith.mulf %16, %19 : vector<1x128xf32>
    %c0_11 = arith.constant 0 : index
    %c0_12 = arith.constant 0 : index
    %21 = vector.load %arg3[%c0_11, %c0_12] : memref<1x128xf32, #tpu.memory_space<vmem>>, vector<1x128xf32>
    %22 = arith.mulf %9, %20 : vector<1x128xf32>
    %23 = arith.subf %21, %22 : vector<1x128xf32>
    %24 = vector.broadcast %20 : vector<1x128xf32> to vector<128x128xf32>
    %25 = arith.mulf %2, %24 : vector<128x128xf32>
    %26 = vector.broadcast %23 : vector<1x128xf32> to vector<128x128xf32>
    %27 = arith.addf %25, %26 : vector<128x128xf32>
    %cst_13 = arith.constant 0.000000e+00 : f32
    %28 = vector.broadcast %cst_13 : f32 to vector<128x128xf32>
    %29 = arith.maximumf %27, %28 : vector<128x128xf32>
    %c0_14 = arith.constant 0 : index
    %c0_15 = arith.constant 0 : index
    %30 = vector.load %arg4[%c0_14, %c0_15] : memref<128x256xf32, #tpu.memory_space<vmem>>, vector<128x256xf32>
    %cst_16 = arith.constant dense<0.000000e+00> : vector<128x256xf32>
    %31 = tpu.matmul %29, %30, %cst_16 {dimension_numbers = #tpu.dot_dimension_numbers<[1], [0], [0], [1], [0, 0, 1, 1], [], []>} : vector<128x128xf32>, vector<128x256xf32>, vector<128x256xf32> -> vector<128x256xf32>
    %c0_17 = arith.constant 0 : index
    %c0_18 = arith.constant 0 : index
    %32 = vector.load %arg5[%c0_17, %c0_18] : memref<1x256xf32, #tpu.memory_space<vmem>>, vector<1x256xf32>
    %33 = vector.broadcast %32 : vector<1x256xf32> to vector<128x256xf32>
    %34 = arith.addf %31, %33 : vector<128x256xf32>
    %c0_19 = arith.constant 0 : index
    %c0_20 = arith.constant 0 : index
    %35 = vector.load %arg6[%c0_19, %c0_20] : memref<128x256xf32, #tpu.memory_space<vmem>>, vector<128x256xf32>
    tpu.vector_store %arg6[%c0_19, %c0_20], %34 {strides = array<i32>} : memref<128x256xf32, #tpu.memory_space<vmem>>, vector<128x256xf32>,
    return
  }
}

</mosaic_0001>

<llo_original>
// kernel: tpu_custom_call.1
$region0: #{tpu_custom_call.1}
  #allocation0 [shape = 'u32[]', space=smem, size = 0x4, offset = 0x4, fixed_abs, tag = 'smem constant byte address 0x4 - core index']
  #allocation1 [shape = 'u32[144,128]{1,0:T(1,128)}', space=vmem, size = 0x12000, scoped, tag = 'internal scratch']
  %s0 = inlined_call_operand.hbm [shape: f32[128,256], index: 0, kind: input, shape index: {}]
  %s1 = inlined_call_operand.hbm [shape: f32[256,128], index: 1, kind: input, shape index: {}]
  %s2 = inlined_call_operand.vmem [shape: f32[1,128], index: 2, kind: input, shape index: {}]
  %s3 = inlined_call_operand.vmem [shape: f32[1,128], index: 3, kind: input, shape index: {}]
  %s4 = inlined_call_operand.hbm [shape: f32[128,256], index: 4, kind: input, shape index: {}]
  %s5 = inlined_call_operand.vmem [shape: f32[1,256], index: 5, kind: input, shape index: {}]
  %s6 = inlined_call_operand.hbm [shape: f32[128,256], index: 6, kind: output, shape index: {}]
  %s7 = sld [smem:[#allocation0]]
  $region46: #{tpu_custom_call.1} parent=0
    _
  %s9 = ssub.s32 1, %s7
  %s10 = scalar_select 0, %s9, %s7
  $region1: #{tpu_custom_call.1} parent=0
    #allocation2 [shape = 'u8[131072]{0}', space=vmem, size = 0x20000, scoped, tag = 'input window, operand 0, single buffered']
    #allocation3 [shape = 's32[1]{0}', space=sflag, size = 0x4, scoped, tag = 'scoped memory for tpu_custom_call.1']
    #allocation4 [shape = 's32[1]{0}', space=sflag, size = 0x4, scoped, tag = 'scoped memory for tpu_custom_call.1']
    #allocation5 [shape = 'u8[131072]{0}', space=vmem, size = 0x20000, scoped, tag = 'input window, operand 1, single buffered']
    #allocation6 [shape = 's32[1]{0}', space=sflag, size = 0x4, scoped, tag = 'scoped memory for tpu_custom_call.1']
    #allocation7 [shape = 'u8[131072]{0}', space=vmem, size = 0x20000, scoped, tag = 'input window, operand 4, single buffered']
    #allocation8 [shape = 'u8[131072]{0}', space=vmem, size = 0x20000, scoped, tag = 'output window, operand 0, single buffered']
    %11 = vsyncpa [#allocation3], 0
    %12 = vsyncpa [#allocation6], 0
    %13 = vsyncpa [#allocation4], 0
    // Predicated region
    $region2: #{tpu_custom_call.1} parent=1 // pred_check
      _
    $region3: #{tpu_custom_call.1} parent=1 // pred_check_branch
      %15 = sbr.rel (0) target = $region5
    $region4: #{tpu_custom_call.1} parent=1 // pred_region
      %s17 = ssub.s32 4096, 4096
      %18 = vsyncadd [#allocation3], %s17
      %s19 = sshll.u32 [#allocation2], 4
      %s20 = int_to_ptr.vmem [resolvable:$true] %s19
      %25 = dma.hbm_to_vmem [thread:$0]  %s0, 4096, %s20, [#allocation3], 256, 256, 16
    $region5: #{tpu_custom_call.1} parent=1 // pred_fallthru
      _
    // Predicated region
    $region6: #{tpu_custom_call.1} parent=1 // pred_check
      _
    $region7: #{tpu_custom_call.1} parent=1 // pred_check_branch
      %27 = sbr.rel (0) target = $region9
    $region8: #{tpu_custom_call.1} parent=1 // pred_region
      %s29 = ssub.s32 4096, 4096
      %30 = vsyncadd [#allocation6], %s29
      %s31 = sshll.u32 [#allocation5], 4
      %s32 = int_to_ptr.vmem [resolvable:$true] %s31
      %37 = dma.hbm_to_vmem [thread:$0]  %s1, 4096, %s32, [#allocation6], 128, 128, 8
    $region9: #{tpu_custom_call.1} parent=1 // pred_fallthru
      _
    // Predicated region
    $region10: #{tpu_custom_call.1} parent=1 // pred_check
      _
    $region11: #{tpu_custom_call.1} parent=1 // pred_check_branch
      %39 = sbr.rel (0) target = $region13
    $region12: #{tpu_custom_call.1} parent=1 // pred_region
      _
    $region13: #{tpu_custom_call.1} parent=1 // pred_fallthru
      _
    // Predicated region
    $region14: #{tpu_custom_call.1} parent=1 // pred_check
      _
    $region15: #{tpu_custom_call.1} parent=1 // pred_check_branch
      %41 = sbr.rel (0) target = $region17
    $region16: #{tpu_custom_call.1} parent=1 // pred_region
      _
    $region17: #{tpu_custom_call.1} parent=1 // pred_fallthru
      _
    // Predicated region
    $region18: #{tpu_custom_call.1} parent=1 // pred_check
      _
    $region19: #{tpu_custom_call.1} parent=1 // pred_check_branch
      %43 = sbr.rel (0) target = $region21
    $region20: #{tpu_custom_call.1} parent=1 // pred_region
      %s45 = ssub.s32 4096, 4096
      %46 = vsyncadd [#allocation6], %s45
      %s47 = sshll.u32 [#allocation7], 4
      %s48 = int_to_ptr.vmem [resolvable:$true] %s47
      %53 = dma.hbm_to_vmem [thread:$0]  %s4, 4096, %s48, [#allocation6], 256, 256, 16
    $region21: #{tpu_custom_call.1} parent=1 // pred_fallthru
      _
    // Predicated region
    $region22: #{tpu_custom_call.1} parent=1 // pred_check
      _
    $region23: #{tpu_custom_call.1} parent=1 // pred_check_branch
      %55 = sbr.rel (0) target = $region25
    $region24: #{tpu_custom_call.1} parent=1 // pred_region
      _
    $region25: #{tpu_custom_call.1} parent=1 // pred_fallthru
      _
    // Predicated region
    $region26: #{tpu_custom_call.1} parent=1 // pred_check
      _
    $region27: #{tpu_custom_call.1} parent=1 // pred_check_branch
      %57 = sbr.rel (0) target = $region29
    $region28: #{tpu_custom_call.1} parent=1 // pred_region
      %58 = dma.done [#allocation3], 4096
    $region29: #{tpu_custom_call.1} parent=1 // pred_fallthru
      _
    // Predicated region
    $region30: #{tpu_custom_call.1} parent=1 // pred_check
      _
    $region31: #{tpu_custom_call.1} parent=1 // pred_check_branch
      %60 = sbr.rel (0) target = $region33
    $region32: #{tpu_custom_call.1} parent=1 // pred_region
      %61 = dma.done [#allocation6], 4096
    $region33: #{tpu_custom_call.1} parent=1 // pred_fallthru
      _
    // Predicated region
    $region34: #{tpu_custom_call.1} parent=1 // pred_check
      _
    $region35: #{tpu_custom_call.1} parent=1 // pred_check_branch
      %63 = sbr.rel (0) target = $region37
    $region36: #{tpu_custom_call.1} parent=1 // pred_region
      %64 = dma.done [#allocation6], 4096
    $region37: #{tpu_custom_call.1} parent=1 // pred_fallthru
      _
    %v65 = vld [vmem:[#allocation2] sm:$0xff]
    %v66 = vld [vmem:[#allocation2 + $0x8] sm:$0xff]
    %v67 = vld [vmem:[#allocation2 + $0x10] sm:$0xff]
    %v68 = vld [vmem:[#allocation2 + $0x18] sm:$0xff]
    %v69 = vld [vmem:[#allocation2 + $0x20] sm:$0xff]
    %v70 = vld [vmem:[#allocation2 + $0x28] sm:$0xff]
    %v71 = vld [vmem:[#allocation2 + $0x30] sm:$0xff]
    %v72 = vld [vmem:[#allocation2 + $0x38] sm:$0xff]
    %v73 = vld [vmem:[#allocation2 + $0x40] sm:$0xff]
    %v74 = vld [vmem:[#allocation2 + $0x48] sm:$0xff]
    %v75 = vld [vmem:[#allocation2 + $0x50] sm:$0xff]
    %v76 = vld [vmem:[#allocation2 + $0x58] sm:$0xff]
    %v77 = vld [vmem:[#allocation2 + $0x60] sm:$0xff]
    %v78 = vld [vmem:[#allocation2 + $0x68] sm:$0xff]
    %v79 = vld [vmem:[#allocation2 + $0x70] sm:$0xff]
    %v80 = vld [vmem:[#allocation2 + $0x78] sm:$0xff]
    %v81 = vld [vmem:[#allocation2 + $0x80] sm:$0xff]
    %v82 = vld [vmem:[#allocation2 + $0x88] sm:$0xff]
    %v83 = vld [vmem:[#allocation2 + $0x90] sm:$0xff]
    %v84 = vld [vmem:[#allocation2 + $0x98] sm:$0xff]
    %v85 = vld [vmem:[#allocation2 + $0xa0] sm:$0xff]
    %v86 = vld [vmem:[#allocation2 + $0xa8] sm:$0xff]
    %v87 = vld [vmem:[#allocation2 + $0xb0] sm:$0xff]
    %v88 = vld [vmem:[#allocation2 + $0xb8] sm:$0xff]
    %v89 = vld [vmem:[#allocation2 + $0xc0] sm:$0xff]
    %v90 = vld [vmem:[#allocation2 + $0xc8] sm:$0xff]
    %v91 = vld [vmem:[#allocation2 + $0xd0] sm:$0xff]
    %v92 = vld [vmem:[#allocation2 + $0xd8] sm:$0xff]
    %v93 = vld [vmem:[#allocation2 + $0xe0] sm:$0xff]
    %v94 = vld [vmem:[#allocation2 + $0xe8] sm:$0xff]
    %v95 = vld [vmem:[#allocation2 + $0xf0] sm:$0xff]
    %v96 = vld [vmem:[#allocation2 + $0xf8] sm:$0xff]
    %v97 = vld [vmem:[#allocation5] sm:$0xff]
    %v98 = vld [vmem:[#allocation5 + $0x8] sm:$0xff]
    %v99 = vld [vmem:[#allocation5 + $0x10] sm:$0xff]
    %v100 = vld [vmem:[#allocation5 + $0x18] sm:$0xff]
    %v101 = vld [vmem:[#allocation5 + $0x20] sm:$0xff]
    %v102 = vld [vmem:[#allocation5 + $0x28] sm:$0xff]
    %v103 = vld [vmem:[#allocation5 + $0x30] sm:$0xff]
    %v104 = vld [vmem:[#allocation5 + $0x38] sm:$0xff]
    %v105 = vld [vmem:[#allocation5 + $0x40] sm:$0xff]
    %v106 = vld [vmem:[#allocation5 + $0x48] sm:$0xff]
    %v107 = vld [vmem:[#allocation5 + $0x50] sm:$0xff]
    %v108 = vld [vmem:[#allocation5 + $0x58] sm:$0xff]
    %v109 = vld [vmem:[#allocation5 + $0x60] sm:$0xff]
    %v110 = vld [vmem:[#allocation5 + $0x68] sm:$0xff]
    %v111 = vld [vmem:[#allocation5 + $0x70] sm:$0xff]
    %v112 = vld [vmem:[#allocation5 + $0x78] sm:$0xff]
    %v113 = vld [vmem:[#allocation5 + $0x80] sm:$0xff]
    %v114 = vld [vmem:[#allocation5 + $0x88] sm:$0xff]
    %v115 = vld [vmem:[#allocation5 + $0x90] sm:$0xff]
    %v116 = vld [vmem:[#allocation5 + $0x98] sm:$0xff]
    %v117 = vld [vmem:[#allocation5 + $0xa0] sm:$0xff]
    %v118 = vld [vmem:[#allocation5 + $0xa8] sm:$0xff]
    %v119 = vld [vmem:[#allocation5 + $0xb0] sm:$0xff]
    %v120 = vld [vmem:[#allocation5 + $0xb8] sm:$0xff]
    %v121 = vld [vmem:[#allocation5 + $0xc0] sm:$0xff]
    %v122 = vld [vmem:[#allocation5 + $0xc8] sm:$0xff]
    %v123 = vld [vmem:[#allocation5 + $0xd0] sm:$0xff]
    %v124 = vld [vmem:[#allocation5 + $0xd8] sm:$0xff]
    %v125 = vld [vmem:[#allocation5 + $0xe0] sm:$0xff]
    %v126 = vld [vmem:[#allocation5 + $0xe8] sm:$0xff]
    %v127 = vld [vmem:[#allocation5 + $0xf0] sm:$0xff]
    %v128 = vld [vmem:[#allocation5 + $0xf8] sm:$0xff]
    %129 = vmatprep.subr.mxu0 0.0
    %130 = vmatpush1.msra.mxu0 %v97
    %131 = vmatprep.subr.mxu0 0.0
    %132 = vmatpush1.msra.mxu0 %v98
    %133 = vmatprep.subr.mxu0 0.0
    %134 = vmatpush1.msra.mxu0 %v99
    %135 = vmatprep.subr.mxu0 0.0
    %136 = vmatpush1.msra.mxu0 %v100
    %137 = vmatprep.subr.mxu0 0.0
    %138 = vmatpush1.msra.mxu0 %v101
    %139 = vmatprep.subr.mxu0 0.0
    %140 = vmatpush1.msra.mxu0 %v102
    %141 = vmatprep.subr.mxu0 0.0
    %142 = vmatpush1.msra.mxu0 %v103
    %143 = vmatprep.subr.mxu0 0.0
    %144 = vmatpush1.msra.mxu0 %v104
    %145 = vmatprep.subr.mxu0 0.0
    %146 = vmatpush1.msra.mxu0 %v105
    %147 = vmatprep.subr.mxu0 0.0
    %148 = vmatpush1.msra.mxu0 %v106
    %149 = vmatprep.subr.mxu0 0.0
    %150 = vmatpush1.msra.mxu0 %v107
    %151 = vmatprep.subr.mxu0 0.0
    %152 = vmatpush1.msra.mxu0 %v108
    %153 = vmatprep.subr.mxu0 0.0
    %154 = vmatpush1.msra.mxu0 %v109
    %155 = vmatprep.subr.mxu0 0.0
    %156 = vmatpush1.msra.mxu0 %v110
    %157 = vmatprep.subr.mxu0 0.0
    %158 = vmatpush1.msra.mxu0 %v111
    %159 = vmatprep.subr.mxu0 0.0
    %160 = vmatpush1.msra.mxu0 %v112
    %161 = vmatprep.subr.mxu0 0.0
    %162 = vmatpush1.msra.mxu0 %v113
    %163 = vmatprep.subr.mxu0 0.0
    %164 = vmatpush1.msra.mxu0 %v114
    %165 = vmatprep.subr.mxu0 0.0
    %166 = vmatpush1.msra.mxu0 %v115
    %167 = vmatprep.subr.mxu0 0.0
    %168 = vmatpush1.msra.mxu0 %v116
    %169 = vmatprep.subr.mxu0 0.0
    %170 = vmatpush1.msra.mxu0 %v117
    %171 = vmatprep.subr.mxu0 0.0
    %172 = vmatpush1.msra.mxu0 %v118
    %173 = vmatprep.subr.mxu0 0.0
    %174 = vmatpush1.msra.mxu0 %v119
    %175 = vmatprep.subr.mxu0 0.0
    %176 = vmatpush1.msra.mxu0 %v120
    %177 = vmatprep.subr.mxu0 0.0
    %178 = vmatpush1.msra.mxu0 %v121
    %179 = vmatprep.subr.mxu0 0.0
    %180 = vmatpush1.msra.mxu0 %v122
    %181 = vmatprep.subr.mxu0 0.0
    %182 = vmatpush1.msra.mxu0 %v123
    %183 = vmatprep.subr.mxu0 0.0
    %184 = vmatpush1.msra.mxu0 %v124
    %185 = vmatprep.subr.mxu0 0.0
    %186 = vmatpush1.msra.mxu0 %v125
    %187 = vmatprep.subr.mxu0 0.0
    %188 = vmatpush1.msra.mxu0 %v126
    %189 = vmatprep.subr.mxu0 0.0
    %190 = vmatpush1.msra.mxu0 %v127
    %191 = vmatprep.subr.mxu0 0.0
    %192 = vmatpush1.msra.mxu0 %v128
    %193 = vmatprep.mubr.f32.mxu0 %v66
    %194 = vmatmul.mubr.f32.gmra.mrb[0].mxu0 %v65
    %v195 = vpop.f32.mrb[0].mxu0
    %v196 = vadd.f32 0.0, %v195
    %v197 = vpop.f32.mrb[0].mxu0
    %198 = vmatprep.mubr.f32.mxu0 %v68
    %199 = vmatmul.mubr.f32.gmra.mrb[0].mxu0 %v67
    %v200 = vpop.f32.mrb[0].mxu0
    %v201 = vadd.f32 0.0, %v200
    %v202 = vpop.f32.mrb[0].mxu0
    %203 = vmatprep.mubr.f32.mxu0 %v70
    %204 = vmatmul.mubr.f32.gmra.mrb[0].mxu0 %v69
    %v205 = vpop.f32.mrb[0].mxu0
    %v206 = vadd.f32 0.0, %v205
    %v207 = vpop.f32.mrb[0].mxu0
    %208 = vmatprep.mubr.f32.mxu0 %v72
    %209 = vmatmul.mubr.f32.gmra.mrb[0].mxu0 %v71
    %v210 = vpop.f32.mrb[0].mxu0
    %v211 = vadd.f32 0.0, %v210
    %v212 = vpop.f32.mrb[0].mxu0
    %213 = vmatprep.mubr.f32.mxu0 %v74
    %214 = vmatmul.mubr.f32.gmra.mrb[0].mxu0 %v73
    %v215 = vpop.f32.mrb[0].mxu0
    %v216 = vadd.f32 0.0, %v215
    %v217 = vpop.f32.mrb[0].mxu0
    %218 = vmatprep.mubr.f32.mxu0 %v76
    %219 = vmatmul.mubr.f32.gmra.mrb[0].mxu0 %v75
    %v220 = vpop.f32.mrb[0].mxu0
    %v221 = vadd.f32 0.0, %v220
    %v222 = vpop.f32.mrb[0].mxu0
    %223 = vmatprep.mubr.f32.mxu0 %v78
    %224 = vmatmul.mubr.f32.gmra.mrb[0].mxu0 %v77
    %v225 = vpop.f32.mrb[0].mxu0
    %v226 = vadd.f32 0.0, %v225
    %v227 = vpop.f32.mrb[0].mxu0
    %228 = vmatprep.mubr.f32.mxu0 %v80
    %229 = vmatmul.mubr.f32.gmra.mrb[0].mxu0 %v79
    %v230 = vpop.f32.mrb[0].mxu0
    %v231 = vadd.f32 0.0, %v230
    %v232 = vpop.f32.mrb[0].mxu0
    %233 = vmatprep.mubr.f32.mxu0 %v82
    %234 = vmatmul.mubr.f32.gmra.mrb[0].mxu0 %v81
    %v235 = vpop.f32.mrb[0].mxu0
    %v236 = vadd.f32 0.0, %v235
    %v237 = vpop.f32.mrb[0].mxu0
    %238 = vmatprep.mubr.f32.mxu0 %v84
    %239 = vmatmul.mubr.f32.gmra.mrb[0].mxu0 %v83
    %v240 = vpop.f32.mrb[0].mxu0
    %v241 = vadd.f32 0.0, %v240
    %v242 = vpop.f32.mrb[0].mxu0
    %243 = vmatprep.mubr.f32.mxu0 %v86
    %244 = vmatmul.mubr.f32.gmra.mrb[0].mxu0 %v85
    %v245 = vpop.f32.mrb[0].mxu0
    %v246 = vadd.f32 0.0, %v245
    %v247 = vpop.f32.mrb[0].mxu0
    %248 = vmatprep.mubr.f32.mxu0 %v88
    %249 = vmatmul.mubr.f32.gmra.mrb[0].mxu0 %v87
    %v250 = vpop.f32.mrb[0].mxu0
    %v251 = vadd.f32 0.0, %v250
    %v252 = vpop.f32.mrb[0].mxu0
    %253 = vmatprep.mubr.f32.mxu0 %v90
    %254 = vmatmul.mubr.f32.gmra.mrb[0].mxu0 %v89
    %v255 = vpop.f32.mrb[0].mxu0
    %v256 = vadd.f32 0.0, %v255
    %v257 = vpop.f32.mrb[0].mxu0
    %258 = vmatprep.mubr.f32.mxu0 %v92
    %259 = vmatmul.mubr.f32.gmra.mrb[0].mxu0 %v91
    %v260 = vpop.f32.mrb[0].mxu0
    %v261 = vadd.f32 0.0, %v260
    %v262 = vpop.f32.mrb[0].mxu0
    %263 = vmatprep.mubr.f32.mxu0 %v94
    %264 = vmatmul.mubr.f32.gmra.mrb[0].mxu0 %v93
    %v265 = vpop.f32.mrb[0].mxu0
    %v266 = vadd.f32 0.0, %v265
    %v267 = vpop.f32.mrb[0].mxu0
    %268 = vmatprep.mubr.f32.mxu0 %v96
    %269 = vmatmul.mubr.f32.gmra.mrb[0].mxu0 %v95
    %v270 = vpop.f32.mrb[0].mxu0
    %v271 = vadd.f32 0.0, %v270
    %v272 = vpop.f32.mrb[0].mxu0
    %273 = vdwg.mxu0
    %v274 = vadd.f32 %v196, %v201
    %v275 = vadd.f32 %v274, %v206
    %v276 = vadd.f32 %v275, %v211
    %v277 = vadd.f32 %v276, %v216
    %v278 = vadd.f32 %v277, %v221
    %v279 = vadd.f32 %v278, %v226
    %v280 = vadd.f32 %v279, %v231
    %v281 = vadd.f32 %v280, %v236
    %v282 = vadd.f32 %v281, %v241
    %v283 = vadd.f32 %v282, %v246
    %v284 = vadd.f32 %v283, %v251
    %v285 = vadd.f32 %v284, %v256
    %v286 = vadd.f32 %v285, %v261
    %v287 = vadd.f32 %v286, %v266
    %v288 = vadd.f32 %v287, %v271
    %v289 = vrot.slane %v288, 4
    %v290 = vadd.f32 %v288, %v289
    %v291 = vrot.slane %v290, 2
    %v292 = vadd.f32 %v290, %v291
    %v293 = vrot.slane %v292, 1
    %v294 = vadd.f32 %v292, %v293
    %v295 = vmul.f32 %v196, %v196
    %v296 = vmul.f32 %v201, %v201
    %v297 = vmul.f32 %v206, %v206
    %v298 = vmul.f32 %v211, %v211
    %v299 = vmul.f32 %v216, %v216
    %v300 = vmul.f32 %v221, %v221
    %v301 = vmul.f32 %v226, %v226
    %v302 = vmul.f32 %v231, %v231
    %v303 = vmul.f32 %v236, %v236
    %v304 = vmul.f32 %v241, %v241
    %v305 = vmul.f32 %v246, %v246
    %v306 = vmul.f32 %v251, %v251
    %v307 = vmul.f32 %v256, %v256
    %v308 = vmul.f32 %v261, %v261
    %v309 = vmul.f32 %v266, %v266
    %v310 = vmul.f32 %v271, %v271
    %v311 = vadd.f32 %v295, %v296
    %v312 = vadd.f32 %v311, %v297
    %v313 = vadd.f32 %v312, %v298
    %v314 = vadd.f32 %v313, %v299
    %v315 = vadd.f32 %v314, %v300
    %v316 = vadd.f32 %v315, %v301
    %v317 = vadd.f32 %v316, %v302
    %v318 = vadd.f32 %v317, %v303
    %v319 = vadd.f32 %v318, %v304
    %v320 = vadd.f32 %v319, %v305
    %v321 = vadd.f32 %v320, %v306
    %v322 = vadd.f32 %v321, %v307
    %v323 = vadd.f32 %v322, %v308
    %v324 = vadd.f32 %v323, %v309
    %v325 = vadd.f32 %v324, %v310
    %v326 = vrot.slane %v325, 4
    %v327 = vadd.f32 %v325, %v326
    %v328 = vrot.slane %v327, 2
    %v329 = vadd.f32 %v327, %v328
    %v330 = vrot.slane %v329, 1
    %v331 = vadd.f32 %v329, %v330
    %v332 = vmul.f32 %v294, 0.0078125
    %v333 = vmul.f32 %v331, 0.0078125
    %v334 = vmul.f32 %v332, %v332
    %v335 = vsub.f32 %v333, %v334
    %v336 = vmax.f32 %v335, 0.0
    %v337 = vld [vmem:[%s2] sm:$0x1]
    %v338 = vadd.f32 %v336, 1e-05
    %v339 = vrsqrt.pop %v338
    %v340 = vmul.f32 %v337, %v339
    %v341 = vld [vmem:[%s3] sm:$0x1]
    %v342 = vmul.f32 %v332, %v340
    %v343 = vsub.f32 %v341, %v342
    %v345 = vlaneseq
    %v346 = vshrl.u32 %v345, 7
    %v347 = vsub.s32 0, %v346
    %v348 = vrot.slane %v340, %v347
    %v350 = vmul.f32 %v196, %v348
    %v351 = vmul.f32 %v201, %v348
    %v352 = vmul.f32 %v206, %v348
    %v353 = vmul.f32 %v211, %v348
    %v354 = vmul.f32 %v216, %v348
    %v355 = vmul.f32 %v221, %v348
    %v356 = vmul.f32 %v226, %v348
    %v357 = vmul.f32 %v231, %v348
    %v358 = vmul.f32 %v236, %v348
    %v359 = vmul.f32 %v241, %v348
    %v360 = vmul.f32 %v246, %v348
    %v361 = vmul.f32 %v251, %v348
    %v362 = vmul.f32 %v256, %v348
    %v363 = vmul.f32 %v261, %v348
    %v364 = vmul.f32 %v266, %v348
    %v365 = vmul.f32 %v271, %v348
    %v367 = vlaneseq
    %v368 = vshrl.u32 %v367, 7
    %v369 = vsub.s32 0, %v368
    %v370 = vrot.slane %v343, %v369
    %v372 = vadd.f32 %v350, %v370
    %v373 = vadd.f32 %v351, %v370
    %v374 = vadd.f32 %v352, %v370
    %v375 = vadd.f32 %v353, %v370
    %v376 = vadd.f32 %v354, %v370
    %v377 = vadd.f32 %v355, %v370
    %v378 = vadd.f32 %v356, %v370
    %v379 = vadd.f32 %v357, %v370
    %v380 = vadd.f32 %v358, %v370
    %v381 = vadd.f32 %v359, %v370
    %v382 = vadd.f32 %v360, %v370
    %v383 = vadd.f32 %v361, %v370
    %v384 = vadd.f32 %v362, %v370
    %v385 = vadd.f32 %v363, %v370
    %v386 = vadd.f32 %v364, %v370
    %v387 = vadd.f32 %v365, %v370
    %v388 = vmax.f32 %v372, 0.0
    %v389 = vmax.f32 %v373, 0.0
    %v390 = vmax.f32 %v374, 0.0
    %v391 = vmax.f32 %v375, 0.0
    %v392 = vmax.f32 %v376, 0.0
    %v393 = vmax.f32 %v377, 0.0
    %v394 = vmax.f32 %v378, 0.0
    %v395 = vmax.f32 %v379, 0.0
    %v396 = vmax.f32 %v380, 0.0
    %v397 = vmax.f32 %v381, 0.0
    %v398 = vmax.f32 %v382, 0.0
    %v399 = vmax.f32 %v383, 0.0
    %v400 = vmax.f32 %v384, 0.0
    %v401 = vmax.f32 %v385, 0.0
    %v402 = vmax.f32 %v386, 0.0
    %v403 = vmax.f32 %v387, 0.0
    %v404 = vld [vmem:[#allocation7] sm:$0xff]
    %v405 = vld [vmem:[#allocation7 + $0x8] sm:$0xff]
    %v406 = vld [vmem:[#allocation7 + $0x10] sm:$0xff]
    %v407 = vld [vmem:[#allocation7 + $0x18] sm:$0xff]
    %v408 = vld [vmem:[#allocation7 + $0x20] sm:$0xff]
    %v409 = vld [vmem:[#allocation7 + $0x28] sm:$0xff]
    %v410 = vld [vmem:[#allocation7 + $0x30] sm:$0xff]
    %v411 = vld [vmem:[#allocation7 + $0x38] sm:$0xff]
    %v412 = vld [vmem:[#allocation7 + $0x40] sm:$0xff]
    %v413 = vld [vmem:[#allocation7 + $0x48] sm:$0xff]
    %v414 = vld [vmem:[#allocation7 + $0x50] sm:$0xff]
    %v415 = vld [vmem:[#allocation7 + $0x58] sm:$0xff]
    %v416 = vld [vmem:[#allocation7 + $0x60] sm:$0xff]
    %v417 = vld [vmem:[#allocation7 + $0x68] sm:$0xff]
    %v418 = vld [vmem:[#allocation7 + $0x70] sm:$0xff]
    %v419 = vld [vmem:[#allocation7 + $0x78] sm:$0xff]
    %v420 = vld [vmem:[#allocation7 + $0x80] sm:$0xff]
    %v421 = vld [vmem:[#allocation7 + $0x88] sm:$0xff]
    %v422 = vld [vmem:[#allocation7 + $0x90] sm:$0xff]
    %v423 = vld [vmem:[#allocation7 + $0x98] sm:$0xff]
    %v424 = vld [vmem:[#allocation7 + $0xa0] sm:$0xff]
    %v425 = vld [vmem:[#allocation7 + $0xa8] sm:$0xff]
    %v426 = vld [vmem:[#allocation7 + $0xb0] sm:$0xff]
    %v427 = vld [vmem:[#allocation7 + $0xb8] sm:$0xff]
    %v428 = vld [vmem:[#allocation7 + $0xc0] sm:$0xff]
    %v429 = vld [vmem:[#allocation7 + $0xc8] sm:$0xff]
    %v430 = vld [vmem:[#allocation7 + $0xd0] sm:$0xff]
    %v431 = vld [vmem:[#allocation7 + $0xd8] sm:$0xff]
    %v432 = vld [vmem:[#allocation7 + $0xe0] sm:$0xff]
    %v433 = vld [vmem:[#allocation7 + $0xe8] sm:$0xff]
    %v434 = vld [vmem:[#allocation7 + $0xf0] sm:$0xff]
    %v435 = vld [vmem:[#allocation7 + $0xf8] sm:$0xff]
    %v436 = vld [vmem:[%s5] sm:$0x3]
    %v438 = vlaneseq
    %v439 = vshrl.u32 %v438, 7
    %v440 = vsub.s32 0, %v439
    %v441 = vrot.slane %v436, %v440
    %v442 = vlaneseq
    %v443 = vshrl.u32 %v442, 7
    %v444 = vsub.s32 1, %v443
    %v445 = vrot.slane %v436, %v444
    %448 = vmatprep.subr.mxu0 %v405
    %449 = vmatpush1.msra.mxu0 %v404
    %450 = vmatprep.subr.mxu0 %v407
    %451 = vmatpush1.msra.mxu0 %v406
    %452 = vmatprep.subr.mxu0 %v409
    %453 = vmatpush1.msra.mxu0 %v408
    %454 = vmatprep.subr.mxu0 %v411
    %455 = vmatpush1.msra.mxu0 %v410
    %456 = vmatprep.subr.mxu0 %v413
    %457 = vmatpush1.msra.mxu0 %v412
    %458 = vmatprep.subr.mxu0 %v415
    %459 = vmatpush1.msra.mxu0 %v414
    %460 = vmatprep.subr.mxu0 %v417
    %461 = vmatpush1.msra.mxu0 %v416
    %462 = vmatprep.subr.mxu0 %v419
    %463 = vmatpush1.msra.mxu0 %v418
    %464 = vmatprep.subr.mxu0 %v421
    %465 = vmatpush1.msra.mxu0 %v420
    %466 = vmatprep.subr.mxu0 %v423
    %467 = vmatpush1.msra.mxu0 %v422
    %468 = vmatprep.subr.mxu0 %v425
    %469 = vmatpush1.msra.mxu0 %v424
    %470 = vmatprep.subr.mxu0 %v427
    %471 = vmatpush1.msra.mxu0 %v426
    %472 = vmatprep.subr.mxu0 %v429
    %473 = vmatpush1.msra.mxu0 %v428
    %474 = vmatprep.subr.mxu0 %v431
    %475 = vmatpush1.msra.mxu0 %v430
    %476 = vmatprep.subr.mxu0 %v433
    %477 = vmatpush1.msra.mxu0 %v432
    %478 = vmatprep.subr.mxu0 %v435
    %479 = vmatpush1.msra.mxu0 %v434
    %480 = vmatprep.subr.mxu0 0.0
    %481 = vmatpush1.msra.mxu0 0.0
    %482 = vmatprep.subr.mxu0 0.0
    %483 = vmatpush1.msra.mxu0 0.0
    %484 = vmatprep.subr.mxu0 0.0
    %485 = vmatpush1.msra.mxu0 0.0
    %486 = vmatprep.subr.mxu0 0.0
    %487 = vmatpush1.msra.mxu0 0.0
    %488 = vmatprep.subr.mxu0 0.0
    %489 = vmatpush1.msra.mxu0 0.0
    %490 = vmatprep.subr.mxu0 0.0
    %491 = vmatpush1.msra.mxu0 0.0
    %492 = vmatprep.subr.mxu0 0.0
    %493 = vmatpush1.msra.mxu0 0.0
    %494 = vmatprep.subr.mxu0 0.0
    %495 = vmatpush1.msra.mxu0 0.0
    %496 = vmatprep.subr.mxu0 0.0
    %497 = vmatpush1.msra.mxu0 0.0
    %498 = vmatprep.subr.mxu0 0.0
    %499 = vmatpush1.msra.mxu0 0.0
    %500 = vmatprep.subr.mxu0 0.0
    %501 = vmatpush1.msra.mxu0 0.0
    %502 = vmatprep.subr.mxu0 0.0
    %503 = vmatpush1.msra.mxu0 0.0
    %504 = vmatprep.subr.mxu0 0.0
    %505 = vmatpush1.msra.mxu0 0.0
    %506 = vmatprep.subr.mxu0 0.0
    %507 = vmatpush1.msra.mxu0 0.0
    %508 = vmatprep.subr.mxu0 0.0
    %509 = vmatpush1.msra.mxu0 0.0
    %510 = vmatprep.subr.mxu0 0.0
    %511 = vmatpush1.msra.mxu0 0.0
    %512 = vmatprep.mubr.f32.mxu0 0.0
    %513 = vmatmul.mubr.f32.gmra.mrb[0].mxu0 %v388
    %v514 = vpop.f32.mrb[0].mxu0
    %v515 = vadd.f32 %v441, %v514
    %v516 = vpop.f32.mrb[0].mxu0
    %v517 = vadd.f32 %v445, %v516
    %518 = vmatprep.mubr.f32.mxu0 0.0
    %519 = vmatmul.mubr.f32.gmra.mrb[0].mxu0 %v389
    %v520 = vpop.f32.mrb[0].mxu0
    %v521 = vadd.f32 %v441, %v520
    %v522 = vpop.f32.mrb[0].mxu0
    %v523 = vadd.f32 %v445, %v522
    %524 = vmatprep.mubr.f32.mxu0 0.0
    %525 = vmatmul.mubr.f32.gmra.mrb[0].mxu0 %v390
    %v526 = vpop.f32.mrb[0].mxu0
    %v527 = vadd.f32 %v441, %v526
    %v528 = vpop.f32.mrb[0].mxu0
    %v529 = vadd.f32 %v445, %v528
    %530 = vmatprep.mubr.f32.mxu0 0.0
    %531 = vmatmul.mubr.f32.gmra.mrb[0].mxu0 %v391
    %v532 = vpop.f32.mrb[0].mxu0
    %v533 = vadd.f32 %v441, %v532
    %v534 = vpop.f32.mrb[0].mxu0
    %v535 = vadd.f32 %v445, %v534
    %536 = vmatprep.mubr.f32.mxu0 0.0
    %537 = vmatmul.mubr.f32.gmra.mrb[0].mxu0 %v392
    %v538 = vpop.f32.mrb[0].mxu0
    %v539 = vadd.f32 %v441, %v538
    %v540 = vpop.f32.mrb[0].mxu0
    %v541 = vadd.f32 %v445, %v540
    %542 = vmatprep.mubr.f32.mxu0 0.0
    %543 = vmatmul.mubr.f32.gmra.mrb[0].mxu0 %v393
    %v544 = vpop.f32.mrb[0].mxu0
    %v545 = vadd.f32 %v441, %v544
    %v546 = vpop.f32.mrb[0].mxu0
    %v547 = vadd.f32 %v445, %v546
    %548 = vmatprep.mubr.f32.mxu0 0.0
    %549 = vmatmul.mubr.f32.gmra.mrb[0].mxu0 %v394
    %v550 = vpop.f32.mrb[0].mxu0
    %v551 = vadd.f32 %v441, %v550
    %v552 = vpop.f32.mrb[0].mxu0
    %v553 = vadd.f32 %v445, %v552
    %554 = vmatprep.mubr.f32.mxu0 0.0
    %555 = vmatmul.mubr.f32.gmra.mrb[0].mxu0 %v395
    %v556 = vpop.f32.mrb[0].mxu0
    %v557 = vadd.f32 %v441, %v556
    %v558 = vpop.f32.mrb[0].mxu0
    %v559 = vadd.f32 %v445, %v558
    %560 = vmatprep.mubr.f32.mxu0 0.0
    %561 = vmatmul.mubr.f32.gmra.mrb[0].mxu0 %v396
    %v562 = vpop.f32.mrb[0].mxu0
    %v563 = vadd.f32 %v441, %v562
    %v564 = vpop.f32.mrb[0].mxu0
    %v565 = vadd.f32 %v445, %v564
    %566 = vmatprep.mubr.f32.mxu0 0.0
    %567 = vmatmul.mubr.f32.gmra.mrb[0].mxu0 %v397
    %v568 = vpop.f32.mrb[0].mxu0
    %v569 = vadd.f32 %v441, %v568
    %v570 = vpop.f32.mrb[0].mxu0
    %v571 = vadd.f32 %v445, %v570
    %572 = vmatprep.mubr.f32.mxu0 0.0
    %573 = vmatmul.mubr.f32.gmra.mrb[0].mxu0 %v398
    %v574 = vpop.f32.mrb[0].mxu0
    %v575 = vadd.f32 %v441, %v574
    %v576 = vpop.f32.mrb[0].mxu0
    %v577 = vadd.f32 %v445, %v576
    %578 = vmatprep.mubr.f32.mxu0 0.0
    %579 = vmatmul.mubr.f32.gmra.mrb[0].mxu0 %v399
    %v580 = vpop.f32.mrb[0].mxu0
    %v581 = vadd.f32 %v441, %v580
    %v582 = vpop.f32.mrb[0].mxu0
    %v583 = vadd.f32 %v445, %v582
    %584 = vmatprep.mubr.f32.mxu0 0.0
    %585 = vmatmul.mubr.f32.gmra.mrb[0].mxu0 %v400
    %v586 = vpop.f32.mrb[0].mxu0
    %v587 = vadd.f32 %v441, %v586
    %v588 = vpop.f32.mrb[0].mxu0
    %v589 = vadd.f32 %v445, %v588
    %590 = vmatprep.mubr.f32.mxu0 0.0
    %591 = vmatmul.mubr.f32.gmra.mrb[0].mxu0 %v401
    %v592 = vpop.f32.mrb[0].mxu0
    %v593 = vadd.f32 %v441, %v592
    %v594 = vpop.f32.mrb[0].mxu0
    %v595 = vadd.f32 %v445, %v594
    %596 = vmatprep.mubr.f32.mxu0 0.0
    %597 = vmatmul.mubr.f32.gmra.mrb[0].mxu0 %v402
    %v598 = vpop.f32.mrb[0].mxu0
    %v599 = vadd.f32 %v441, %v598
    %v600 = vpop.f32.mrb[0].mxu0
    %v601 = vadd.f32 %v445, %v600
    %602 = vmatprep.mubr.f32.mxu0 0.0
    %603 = vmatmul.mubr.f32.gmra.mrb[0].mxu0 %v403
    %v604 = vpop.f32.mrb[0].mxu0
    %v605 = vadd.f32 %v441, %v604
    %v606 = vpop.f32.mrb[0].mxu0
    %v607 = vadd.f32 %v445, %v606
    %608 = vdwg.mxu0
    %609 = vst [vmem:[#allocation8] sm:$0xff] %v515
    %610 = vst [vmem:[#allocation8 + $0x8] sm:$0xff] %v517
    %611 = vst [vmem:[#allocation8 + $0x10] sm:$0xff] %v521
    %612 = vst [vmem:[#allocation8 + $0x18] sm:$0xff] %v523
    %613 = vst [vmem:[#allocation8 + $0x20] sm:$0xff] %v527
    %614 = vst [vmem:[#allocation8 + $0x28] sm:$0xff] %v529
    %615 = vst [vmem:[#allocation8 + $0x30] sm:$0xff] %v533
    %616 = vst [vmem:[#allocation8 + $0x38] sm:$0xff] %v535
    %617 = vst [vmem:[#allocation8 + $0x40] sm:$0xff] %v539
    %618 = vst [vmem:[#allocation8 + $0x48] sm:$0xff] %v541
    %619 = vst [vmem:[#allocation8 + $0x50] sm:$0xff] %v545
    %620 = vst [vmem:[#allocation8 + $0x58] sm:$0xff] %v547
    %621 = vst [vmem:[#allocation8 + $0x60] sm:$0xff] %v551
    %622 = vst [vmem:[#allocation8 + $0x68] sm:$0xff] %v553
    %623 = vst [vmem:[#allocation8 + $0x70] sm:$0xff] %v557
    %624 = vst [vmem:[#allocation8 + $0x78] sm:$0xff] %v559
    %625 = vst [vmem:[#allocation8 + $0x80] sm:$0xff] %v563
    %626 = vst [vmem:[#allocation8 + $0x88] sm:$0xff] %v565
    %627 = vst [vmem:[#allocation8 + $0x90] sm:$0xff] %v569
    %628 = vst [vmem:[#allocation8 + $0x98] sm:$0xff] %v571
    %629 = vst [vmem:[#allocation8 + $0xa0] sm:$0xff] %v575
    %630 = vst [vmem:[#allocation8 + $0xa8] sm:$0xff] %v577
    %631 = vst [vmem:[#allocation8 + $0xb0] sm:$0xff] %v581
    %632 = vst [vmem:[#allocation8 + $0xb8] sm:$0xff] %v583
    %633 = vst [vmem:[#allocation8 + $0xc0] sm:$0xff] %v587
    %634 = vst [vmem:[#allocation8 + $0xc8] sm:$0xff] %v589
    %635 = vst [vmem:[#allocation8 + $0xd0] sm:$0xff] %v593
    %636 = vst [vmem:[#allocation8 + $0xd8] sm:$0xff] %v595
    %637 = vst [vmem:[#allocation8 + $0xe0] sm:$0xff] %v599
    %638 = vst [vmem:[#allocation8 + $0xe8] sm:$0xff] %v601
    %639 = vst [vmem:[#allocation8 + $0xf0] sm:$0xff] %v605
    %640 = vst [vmem:[#allocation8 + $0xf8] sm:$0xff] %v607
    // Predicated region
    $region38: #{tpu_custom_call.1} parent=1 // pred_check
      _
    $region39: #{tpu_custom_call.1} parent=1 // pred_check_branch
      %642 = sbr.rel (0) target = $region41
    $region40: #{tpu_custom_call.1} parent=1 // pred_region
      %s644 = ssub.s32 4096, 4096
      %645 = vsyncadd [#allocation4], %s644
      %s646 = sshll.u32 [#allocation8], 4
      %s647 = int_to_ptr.vmem [resolvable:$true] %s646
      %652 = dma.vmem_to_hbm [thread:$0]  %s647, 4096, %s6, [#allocation4], 256, 256, 16
    $region41: #{tpu_custom_call.1} parent=1 // pred_fallthru
      _
    // Predicated region
    $region42: #{tpu_custom_call.1} parent=1 // pred_check
      _
    $region43: #{tpu_custom_call.1} parent=1 // pred_check_branch
      %654 = sbr.rel (0) target = $region45
    $region44: #{tpu_custom_call.1} parent=1 // pred_region
      %655 = dma.done [#allocation4], 4096
    $region45: #{tpu_custom_call.1} parent=1 // pred_fallthru
      _
    %656 = vsyncpa [#allocation3], 1
    %657 = vsyncpa [#allocation6], 1
    %658 = vsyncpa [#allocation4], 1

</llo_original>
